<compile_context>
chip_gen: v7x
topology: tpu7x:2x2x1
jax: 0.10.0
libtpu: 0.0.40
codegen_flags: <defaults>
</compile_context>

<pallas_src>
import functools

import jax
import jax.numpy as jnp
from jax import lax
from jax.experimental import pallas as pl
from jax.experimental.pallas import tpu as pltpu

EPS = 1e-5


def conv_block_kernel(x_ref, wt1_ref, wt2_ref, p_ref, out_ref, *,
                      h_size, w_groups):
    """Whole-problem kernel (grid=(1,)); all refs are full-array VMEM blocks.

    x_ref   : (N*H, W*Cin)        bf16  input, channels-minor, W folded in lanes
    wt1_ref : (3*W*Cin,  W*Cout)  bf16  conv1 Toeplitz weights (kh folded in K)
    wt2_ref : (3*W*Cout, W*Cout)  bf16  conv2 Toeplitz weights
    p_ref   : (4, W*Cout)         f32   rows = [gamma1, beta1, gamma2, beta2],
                                        each tiled onto the (w, c) lane pattern
    out_ref : (N*H, W*Cout)       f32   lane-dense output slab
    """
    f32 = jnp.float32
    nh = x_ref.shape[0]
    wco = out_ref.shape[1]
    c_out = wco // w_groups
    inv_count = 1.0 / float(nh * w_groups)        # 1 / (N*H*W)
    n_fold = w_groups.bit_length() - 1            # log2(W); W is a power of 2

    # Row index -> position within the image height (for the 1-row H halo).
    row = lax.broadcasted_iota(jnp.int32, (nh, 1), 0)
    h_pos = row % h_size
    not_top = h_pos != 0
    not_bot = h_pos != (h_size - 1)

    def shift_rows(v):
        # v at row h-1 / h+1 with zeros at image boundaries: XLU sublane rolls
        # + mask (circular wrap and batch boundaries are both masked out).
        prev_r = jnp.where(not_top, pltpu.roll(v, 1, axis=0), 0.0)
        next_r = jnp.where(not_bot, pltpu.roll(v, v.shape[0] - 1, axis=0), 0.0)
        return prev_r, next_r

    def fold_lanes(rowvec):
        # Circular roll-and-add butterfly over the W lane-groups (size Cout):
        # per-channel sum, already broadcast back to every (w, c) lane.
        s = rowvec
        for k in range(n_fold):
            s = s + pltpu.roll(s, c_out * (1 << k), axis=1)
        return s

    def bn_relu(acc, gamma, beta):
        # Training-mode BatchNorm2d (biased /N variance, centered two-pass,
        # all f32) fused with ReLU.  Rows reduced first (cheap sublane
        # reduce), then the lane butterfly folds/broadcasts the W groups.
        mean = fold_lanes(jnp.sum(acc, axis=0, keepdims=True)) * inv_count
        d = acc - mean
        var = fold_lanes(jnp.sum(d * d, axis=0, keepdims=True)) * inv_count
        scale = gamma * lax.rsqrt(var + EPS)      # (1, W*Cout) row
        return jnp.maximum(d * scale + beta, 0.0)

    # ---- conv1: one bf16 MXU matmul, K = 3*W*Cin (kh taps folded into K).
    x0 = x_ref[...].astype(f32)
    xm1, xp1 = shift_rows(x0)
    lhs1 = jnp.concatenate([xm1, x0, xp1], axis=1).astype(jnp.bfloat16)
    acc1 = jnp.dot(lhs1, wt1_ref[...], preferred_element_type=f32)
    y1 = bn_relu(acc1, p_ref[0:1, :], p_ref[1:2, :])

    # ---- conv2: same, K = 3*W*Cout (concat blocks are 128-lane aligned).
    ym1, yp1 = shift_rows(y1)
    lhs2 = jnp.concatenate([ym1, y1, yp1], axis=1).astype(jnp.bfloat16)
    acc2 = jnp.dot(lhs2, wt2_ref[...], preferred_element_type=f32)
    y2 = bn_relu(acc2, p_ref[2:3, :], p_ref[3:4, :])

    # Lane-dense (N*H, W*Cout) store -> unmasked vst.
    out_ref[...] = y2.astype(out_ref.dtype)


def _toeplitz_conv_weights(w_hwio, width):
    """(3, 3, Cin, Cout) HWIO -> (3*width*Cin, width*Cout).

    Row index kh*width*Cin + i*Cin + ci multiplies the (kh-1)-row-shifted
    input at W-column i, channel ci; column index w*Cout + co is the output
    at W-column w, channel co.  Taps with i = w + kw - 1 outside [0, width)
    are dropped, implementing the zero padding along W inside the weights.
    The kh row shift is applied to the activations (sublane roll) in-kernel.
    """
    _, _, cin, cout = w_hwio.shape
    i_idx = jnp.arange(width)[None, :, None]         # input W column
    w_idx = jnp.arange(width)[None, None, :]         # output W column
    kw_idx = jnp.arange(3)[:, None, None]            # kw tap
    sel = (i_idx == w_idx + kw_idx - 1).astype(w_hwio.dtype)    # (3, W, W)
    wt = jnp.einsum('kiw,hkco->hicwo', sel, w_hwio)  # (3, W, Cin, W, Cout)
    return wt.reshape(3 * width * cin, width * cout)


def conv_block(x_nchw, params):
    """ConvBlock forward. x_nchw: (N, Cin, H, W) float32 -> (N, Cout, H, W)."""
    w1, b1, g1, be1, w2, b2, g2, be2 = params
    del b1, b2   # exact no-ops: pre-BN per-channel bias cancels in train-mode BN
    N, Cin, H, W = x_nchw.shape
    Cout = w1.shape[-1]
    assert W > 0 and (W & (W - 1)) == 0, "lane butterfly assumes power-of-two W"
    WCi, WCo = W * Cin, W * Cout
    NH = N * H

    # NCHW -> lane-dense (N*H, W*Cin) bf16 MXU operand (no padding in HBM).
    x_flat = (jnp.transpose(x_nchw, (0, 2, 3, 1))
              .reshape(NH, WCi).astype(jnp.bfloat16))

    wt1 = _toeplitz_conv_weights(w1, W).astype(jnp.bfloat16)   # (3*WCi, WCo)
    wt2 = _toeplitz_conv_weights(w2, W).astype(jnp.bfloat16)   # (3*WCo, WCo)

    # gamma/beta for both BNs packed into one block, tiled onto (w, c) lanes.
    tile_c = lambda v: jnp.tile(v.astype(jnp.float32), W)
    p = jnp.stack([tile_c(g1), tile_c(be1), tile_c(g2), tile_c(be2)])  # (4, WCo)

    # Matmul FLOPs actually issued (the Toeplitz fold inflates MACs by ~W/3).
    flops = 2 * NH * (3 * WCi) * WCo + 2 * NH * (3 * WCo) * WCo
    bytes_accessed = (x_flat.size * 2 + (wt1.size + wt2.size) * 2
                      + p.size * 4 + NH * WCo * 4)

    full = lambda shape: pl.BlockSpec(shape, lambda i: (0, 0))

    # TODO(synk): for large N*H*W, tile NH into row strips (1-row halo) on a
    # "parallel" grid axis with per-strip partial BN moments and a small
    # finalize pass; size strips for v7x's 64 MiB VMEM (2 TensorCores) and
    # use ~2x larger strips / higher vmem_limit_bytes on v5e/v6e (128 MiB).
    # TODO(synk): for larger W or Cin the Toeplitz-over-W fold inflates MXU
    # MACs by W/3 and weights by W^2*C -- switch to im2row over (kh,kw,cin).
    out_flat = pl.pallas_call(
        functools.partial(conv_block_kernel, h_size=H, w_groups=W),
        out_shape=jax.ShapeDtypeStruct((NH, WCo), x_nchw.dtype),
        grid=(1,),
        in_specs=[full((NH, WCi)),
                  full((3 * WCi, WCo)),
                  full((3 * WCo, WCo)),
                  full((4, WCo))],
        out_specs=full((NH, WCo)),
        compiler_params=pltpu.CompilerParams(
            dimension_semantics=("arbitrary",),
            vmem_limit_bytes=32 * 1024 * 1024),
        cost_estimate=pl.CostEstimate(flops=flops, transcendentals=2 * WCo,
                                      bytes_accessed=bytes_accessed),
    )(x_flat, wt1, wt2, p)

    # (N*H, W*Cout) -> NCHW (boundary glue, not the hot path).
    return jnp.transpose(out_flat.reshape(N, H, W, Cout), (0, 3, 1, 2))


def conv_block_reference(x_nchw, params, matmul_dtype=jnp.float32):
    """Pure-JAX reference (PyTorch ConvBlock, training-mode BN, WITH biases).

    matmul_dtype=jnp.bfloat16 reproduces the kernel's bf16 MXU operand cast
    (f32 accumulation, f32 BatchNorm) for a tight numerical comparison.
    """
    w1, b1, g1, be1, w2, b2, g2, be2 = params
    x = jnp.transpose(x_nchw, (0, 2, 3, 1))

    def block(x, w, b, g, be):
        y = lax.conv_general_dilated(
            x.astype(matmul_dtype), w.astype(matmul_dtype), (1, 1), "SAME",
            dimension_numbers=("NHWC", "HWIO", "NHWC"),
            preferred_element_type=jnp.float32) + b
        m = jnp.mean(y, axis=(0, 1, 2), keepdims=True)
        v = jnp.mean((y - m) ** 2, axis=(0, 1, 2), keepdims=True)
        y = (y - m) * lax.rsqrt(v + EPS) * g + be
        return jnp.maximum(y, 0.0)

    y = block(x, w1, b1, g1, be1)
    y = block(y, w2, b2, g2, be2)
    return jnp.transpose(y, (0, 3, 1, 2))


if __name__ == "__main__":
    N, Cin, Cout, H, W = 2, 4, 8, 16, 16

    key = jax.random.PRNGKey(0)
    ks = jax.random.split(key, 9)

    x = jax.random.normal(ks[0], (N, Cin, H, W), jnp.float32)

    # Deterministic synthetic parameters (HWIO conv weights).
    w1 = 0.1 * jax.random.normal(ks[1], (3, 3, Cin, Cout), jnp.float32)
    b1 = 0.1 * jax.random.normal(ks[2], (Cout,), jnp.float32)
    g1 = 1.0 + 0.1 * jax.random.normal(ks[3], (Cout,), jnp.float32)
    be1 = 0.1 * jax.random.normal(ks[4], (Cout,), jnp.float32)
    w2 = 0.1 * jax.random.normal(ks[5], (3, 3, Cout, Cout), jnp.float32)
    b2 = 0.1 * jax.random.normal(ks[6], (Cout,), jnp.float32)
    g2 = 1.0 + 0.1 * jax.random.normal(ks[7], (Cout,), jnp.float32)
    be2 = 0.1 * jax.random.normal(ks[8], (Cout,), jnp.float32)

    params = (w1, b1, g1, be1, w2, b2, g2, be2)

    out = jax.block_until_ready(conv_block(x, params))
    assert out.shape == (N, Cout, H, W), out.shape

    # Tight check vs a reference that matches the kernel's bf16 MXU operands
    # (f32 accumulation, f32 BatchNorm).  The reference includes the conv
    # biases, verifying their in-kernel removal is exact under train-mode BN.
    ref_bf16 = jax.block_until_ready(
        conv_block_reference(x, params, jnp.bfloat16))
    assert jnp.allclose(out, ref_bf16, rtol=5e-3, atol=5e-3), (
        float(jnp.max(jnp.abs(out - ref_bf16))))

    # Semantic check vs the pure-f32 PyTorch-equivalent reference (looser
    # tolerance accounts for the bf16 matmul-operand cast).
    ref_f32 = jax.block_until_ready(
        conv_block_reference(x, params, jnp.float32))
    assert jnp.allclose(out, ref_f32, rtol=5e-2, atol=5e-2), (
        float(jnp.max(jnp.abs(out - ref_f32))))

    print("KERNEL_OK")
</pallas_src>

<mosaic_0001>
module attributes {stable_mosaic.version = 11 : i64} {
  func.func @conv_block_kernel(%arg0: i32, %arg1: memref<32x64xbf16, #tpu.memory_space<vmem>>, %arg2: memref<192x128xbf16, #tpu.memory_space<vmem>>, %arg3: memref<384x128xbf16, #tpu.memory_space<vmem>>, %arg4: memref<4x128xf32, #tpu.memory_space<vmem>>, %arg5: memref<32x128xf32, #tpu.memory_space<vmem>>) attributes {dimension_semantics = [#tpu.dimension_semantics<arbitrary>], iteration_bounds = array<i64: 1>, scalar_prefetch = 0 : i64, scratch_operands = 0 : i64, tpu.core_type = #tpu.core_type<tc>, window_params = [{pipeline_mode = #tpu.pipeline_mode<synchronous>, transform_indices = @transform_0, window_bounds = array<i64: 32, 64>}, {pipeline_mode = #tpu.pipeline_mode<synchronous>, transform_indices = @transform_1, window_bounds = array<i64: 192, 128>}, {pipeline_mode = #tpu.pipeline_mode<synchronous>, transform_indices = @transform_2, window_bounds = array<i64: 384, 128>}, {pipeline_mode = #tpu.pipeline_mode<synchronous>, transform_indices = @transform_3, window_bounds = array<i64: 4, 128>}, {pipeline_mode = #tpu.pipeline_mode<synchronous>, transform_indices = @transform_4, window_bounds = array<i64: 32, 128>}]} {
    %0 = tpu.iota {dimensions = array<i32: 0>} : vector<32x1xi32>
    %c16_i32 = arith.constant 16 : i32
    %c0_i32 = arith.constant 0 : i32
    %1 = arith.cmpi eq, %c16_i32, %c0_i32 : i32
    %c1_i32 = arith.constant 1 : i32
    %2 = arith.select %1, %c1_i32, %c16_i32 : i32
    %3 = vector.broadcast %2 : i32 to vector<32x1xi32>
    %4 = arith.remsi %0, %3 : vector<32x1xi32>
    %c0_i32_0 = arith.constant 0 : i32
    %5 = vector.broadcast %c0_i32_0 : i32 to vector<32x1xi32>
    %6 = arith.cmpi ne, %4, %5 : vector<32x1xi32>
    %c0_i32_1 = arith.constant 0 : i32
    %7 = vector.broadcast %c0_i32_1 : i32 to vector<32x1xi32>
    %8 = arith.cmpi slt, %4, %7 : vector<32x1xi32>
    %c0_i32_2 = arith.constant 0 : i32
    %9 = arith.cmpi slt, %2, %c0_i32_2 : i32
    %10 = vector.broadcast %9 : i1 to vector<32x1xi1>
    %11 = vector.broadcast %10 : vector<32x1xi1> to vector<32x1xi1>
    %12 = arith.xori %8, %11 : vector<32x1xi1>
    %13 = arith.andi %12, %6 : vector<32x1xi1>
    %14 = vector.broadcast %2 : i32 to vector<32x1xi32>
    %15 = arith.addi %4, %14 : vector<32x1xi32>
    %16 = arith.select %13, %15, %4 : vector<32x1xi1>, vector<32x1xi32>
    %c0_i32_3 = arith.constant 0 : i32
    %17 = vector.broadcast %c0_i32_3 : i32 to vector<32x1xi32>
    %18 = arith.cmpi ne, %16, %17 : vector<32x1xi32>
    %c15_i32 = arith.constant 15 : i32
    %19 = vector.broadcast %c15_i32 : i32 to vector<32x1xi32>
    %20 = arith.cmpi ne, %16, %19 : vector<32x1xi32>
    %c0 = arith.constant 0 : index
    %c0_4 = arith.constant 0 : index
    %21 = vector.load %arg1[%c0, %c0_4] : memref<32x64xbf16, #tpu.memory_space<vmem>>, vector<32x64xbf16>
    %22 = arith.extf %21 : vector<32x64xbf16> to vector<32x64xf32>
    %c1_i32_5 = arith.constant 1 : i32
    %23 = tpu.dynamic_rotate %22 by %c1_i32_5 dim 0 : vector<32x64xf32>, i32 -> vector<32x64xf32>
    %cst = arith.constant 0.000000e+00 : f32
    %24 = vector.shape_cast %18 : vector<32x1xi1> to vector<32x1xi1>
    %25 = vector.broadcast %24 : vector<32x1xi1> to vector<32x64xi1>
    %26 = vector.broadcast %cst : f32 to vector<32x64xf32>
    %27 = arith.select %25, %23, %26 : vector<32x64xi1>, vector<32x64xf32>
    %c31_i32 = arith.constant 31 : i32
    %28 = tpu.dynamic_rotate %22 by %c31_i32 dim 0 : vector<32x64xf32>, i32 -> vector<32x64xf32>
    %cst_6 = arith.constant 0.000000e+00 : f32
    %29 = vector.shape_cast %20 : vector<32x1xi1> to vector<32x1xi1>
    %30 = vector.broadcast %29 : vector<32x1xi1> to vector<32x64xi1>
    %31 = vector.broadcast %cst_6 : f32 to vector<32x64xf32>
    %32 = arith.select %30, %28, %31 : vector<32x64xi1>, vector<32x64xf32>
    %33 = tpu.concatenate %27, %22, %32 in 1 : vector<32x64xf32>, vector<32x64xf32>, vector<32x64xf32> -> vector<32x192xf32>
    %34 = arith.truncf %33 : vector<32x192xf32> to vector<32x192xbf16>
    %c0_7 = arith.constant 0 : index
    %c0_8 = arith.constant 0 : index
    %35 = vector.load %arg2[%c0_7, %c0_8] : memref<192x128xbf16, #tpu.memory_space<vmem>>, vector<192x128xbf16>
    %cst_9 = arith.constant dense<0.000000e+00> : vector<32x128xf32>
    %36 = tpu.matmul %34, %35, %cst_9 {dimension_numbers = #tpu.dot_dimension_numbers<[1], [0], [0], [1], [0, 0, 1, 1], [], []>} : vector<32x192xbf16>, vector<192x128xbf16>, vector<32x128xf32> -> vector<32x128xf32>
    %c0_10 = arith.constant 0 : index
    %c0_11 = arith.constant 0 : index
    %37 = vector.load %arg4[%c0_10, %c0_11] : memref<4x128xf32, #tpu.memory_space<vmem>>, vector<1x128xf32>
    %c1 = arith.constant 1 : index
    %c0_12 = arith.constant 0 : index
    %38 = vector.load %arg4[%c1, %c0_12] : memref<4x128xf32, #tpu.memory_space<vmem>>, vector<1x128xf32>
    %cst_13 = arith.constant dense<0.000000e+00> : vector<128xf32>
    %39 = vector.multi_reduction <add>, %36, %cst_13 [0] : vector<32x128xf32> to vector<128xf32>
    %40 = vector.shape_cast %39 : vector<128xf32> to vector<1x128xf32>
    %c8_i32 = arith.constant 8 : i32
    %41 = tpu.dynamic_rotate %40 by %c8_i32 dim 1 : vector<1x128xf32>, i32 -> vector<1x128xf32>
    %42 = arith.addf %40, %41 : vector<1x128xf32>
    %c16_i32_14 = arith.constant 16 : i32
    %43 = tpu.dynamic_rotate %42 by %c16_i32_14 dim 1 : vector<1x128xf32>, i32 -> vector<1x128xf32>
    %44 = arith.addf %42, %43 : vector<1x128xf32>
    %c32_i32 = arith.constant 32 : i32
    %45 = tpu.dynamic_rotate %44 by %c32_i32 dim 1 : vector<1x128xf32>, i32 -> vector<1x128xf32>
    %46 = arith.addf %44, %45 : vector<1x128xf32>
    %c64_i32 = arith.constant 64 : i32
    %47 = tpu.dynamic_rotate %46 by %c64_i32 dim 1 : vector<1x128xf32>, i32 -> vector<1x128xf32>
    %48 = arith.addf %46, %47 : vector<1x128xf32>
    %cst_15 = arith.constant 0.001953125 : f32
    %49 = vector.broadcast %cst_15 : f32 to vector<1x128xf32>
    %50 = arith.mulf %48, %49 : vector<1x128xf32>
    %51 = vector.broadcast %50 : vector<1x128xf32> to vector<32x128xf32>
    %52 = arith.subf %36, %51 : vector<32x128xf32>
    %53 = arith.mulf %52, %52 : vector<32x128xf32>
    %cst_16 = arith.constant dense<0.000000e+00> : vector<128xf32>
    %54 = vector.multi_reduction <add>, %53, %cst_16 [0] : vector<32x128xf32> to vector<128xf32>
    %55 = vector.shape_cast %54 : vector<128xf32> to vector<1x128xf32>
    %c8_i32_17 = arith.constant 8 : i32
    %56 = tpu.dynamic_rotate %55 by %c8_i32_17 dim 1 : vector<1x128xf32>, i32 -> vector<1x128xf32>
    %57 = arith.addf %55, %56 : vector<1x128xf32>
    %c16_i32_18 = arith.constant 16 : i32
    %58 = tpu.dynamic_rotate %57 by %c16_i32_18 dim 1 : vector<1x128xf32>, i32 -> vector<1x128xf32>
    %59 = arith.addf %57, %58 : vector<1x128xf32>
    %c32_i32_19 = arith.constant 32 : i32
    %60 = tpu.dynamic_rotate %59 by %c32_i32_19 dim 1 : vector<1x128xf32>, i32 -> vector<1x128xf32>
    %61 = arith.addf %59, %60 : vector<1x128xf32>
    %c64_i32_20 = arith.constant 64 : i32
    %62 = tpu.dynamic_rotate %61 by %c64_i32_20 dim 1 : vector<1x128xf32>, i32 -> vector<1x128xf32>
    %63 = arith.addf %61, %62 : vector<1x128xf32>
    %cst_21 = arith.constant 0.001953125 : f32
    %64 = vector.broadcast %cst_21 : f32 to vector<1x128xf32>
    %65 = arith.mulf %63, %64 : vector<1x128xf32>
    %cst_22 = arith.constant 9.99999974E-6 : f32
    %66 = vector.broadcast %cst_22 : f32 to vector<1x128xf32>
    %67 = arith.addf %65, %66 : vector<1x128xf32>
    %68 = math.rsqrt %67 : vector<1x128xf32>
    %69 = arith.mulf %37, %68 : vector<1x128xf32>
    %70 = vector.broadcast %69 : vector<1x128xf32> to vector<32x128xf32>
    %71 = arith.mulf %52, %70 : vector<32x128xf32>
    %72 = vector.broadcast %38 : vector<1x128xf32> to vector<32x128xf32>
    %73 = arith.addf %71, %72 : vector<32x128xf32>
    %cst_23 = arith.constant 0.000000e+00 : f32
    %74 = vector.broadcast %cst_23 : f32 to vector<32x128xf32>
    %75 = arith.maximumf %73, %74 : vector<32x128xf32>
    %c1_i32_24 = arith.constant 1 : i32
    %76 = tpu.dynamic_rotate %75 by %c1_i32_24 dim 0 : vector<32x128xf32>, i32 -> vector<32x128xf32>
    %cst_25 = arith.constant 0.000000e+00 : f32
    %77 = vector.shape_cast %18 : vector<32x1xi1> to vector<32x1xi1>
    %78 = vector.broadcast %77 : vector<32x1xi1> to vector<32x128xi1>
    %79 = vector.broadcast %cst_25 : f32 to vector<32x128xf32>
    %80 = arith.select %78, %76, %79 : vector<32x128xi1>, vector<32x128xf32>
    %c31_i32_26 = arith.constant 31 : i32
    %81 = tpu.dynamic_rotate %75 by %c31_i32_26 dim 0 : vector<32x128xf32>, i32 -> vector<32x128xf32>
    %cst_27 = arith.constant 0.000000e+00 : f32
    %82 = vector.shape_cast %20 : vector<32x1xi1> to vector<32x1xi1>
    %83 = vector.broadcast %82 : vector<32x1xi1> to vector<32x128xi1>
    %84 = vector.broadcast %cst_27 : f32 to vector<32x128xf32>
    %85 = arith.select %83, %81, %84 : vector<32x128xi1>, vector<32x128xf32>
    %86 = tpu.concatenate %80, %75, %85 in 1 : vector<32x128xf32>, vector<32x128xf32>, vector<32x128xf32> -> vector<32x384xf32>
    %87 = arith.truncf %86 : vector<32x384xf32> to vector<32x384xbf16>
    %c0_28 = arith.constant 0 : index
    %c0_29 = arith.constant 0 : index
    %88 = vector.load %arg3[%c0_28, %c0_29] : memref<384x128xbf16, #tpu.memory_space<vmem>>, vector<384x128xbf16>
    %cst_30 = arith.constant dense<0.000000e+00> : vector<32x128xf32>
    %89 = tpu.matmul %87, %88, %cst_30 {dimension_numbers = #tpu.dot_dimension_numbers<[1], [0], [0], [1], [0, 0, 1, 1], [], []>} : vector<32x384xbf16>, vector<384x128xbf16>, vector<32x128xf32> -> vector<32x128xf32>
    %c2 = arith.constant 2 : index
    %c0_31 = arith.constant 0 : index
    %90 = vector.load %arg4[%c2, %c0_31] : memref<4x128xf32, #tpu.memory_space<vmem>>, vector<1x128xf32>
    %c3 = arith.constant 3 : index
    %c0_32 = arith.constant 0 : index
    %91 = vector.load %arg4[%c3, %c0_32] : memref<4x128xf32, #tpu.memory_space<vmem>>, vector<1x128xf32>
    %cst_33 = arith.constant dense<0.000000e+00> : vector<128xf32>
    %92 = vector.multi_reduction <add>, %89, %cst_33 [0] : vector<32x128xf32> to vector<128xf32>
    %93 = vector.shape_cast %92 : vector<128xf32> to vector<1x128xf32>
    %c8_i32_34 = arith.constant 8 : i32
    %94 = tpu.dynamic_rotate %93 by %c8_i32_34 dim 1 : vector<1x128xf32>, i32 -> vector<1x128xf32>
    %95 = arith.addf %93, %94 : vector<1x128xf32>
    %c16_i32_35 = arith.constant 16 : i32
    %96 = tpu.dynamic_rotate %95 by %c16_i32_35 dim 1 : vector<1x128xf32>, i32 -> vector<1x128xf32>
    %97 = arith.addf %95, %96 : vector<1x128xf32>
    %c32_i32_36 = arith.constant 32 : i32
    %98 = tpu.dynamic_rotate %97 by %c32_i32_36 dim 1 : vector<1x128xf32>, i32 -> vector<1x128xf32>
    %99 = arith.addf %97, %98 : vector<1x128xf32>
    %c64_i32_37 = arith.constant 64 : i32
    %100 = tpu.dynamic_rotate %99 by %c64_i32_37 dim 1 : vector<1x128xf32>, i32 -> vector<1x128xf32>
    %101 = arith.addf %99, %100 : vector<1x128xf32>
    %cst_38 = arith.constant 0.001953125 : f32
    %102 = vector.broadcast %cst_38 : f32 to vector<1x128xf32>
    %103 = arith.mulf %101, %102 : vector<1x128xf32>
    %104 = vector.broadcast %103 : vector<1x128xf32> to vector<32x128xf32>
    %105 = arith.subf %89, %104 : vector<32x128xf32>
    %106 = arith.mulf %105, %105 : vector<32x128xf32>
    %cst_39 = arith.constant dense<0.000000e+00> : vector<128xf32>
    %107 = vector.multi_reduction <add>, %106, %cst_39 [0] : vector<32x128xf32> to vector<128xf32>
    %108 = vector.shape_cast %107 : vector<128xf32> to vector<1x128xf32>
    %c8_i32_40 = arith.constant 8 : i32
    %109 = tpu.dynamic_rotate %108 by %c8_i32_40 dim 1 : vector<1x128xf32>, i32 -> vector<1x128xf32>
    %110 = arith.addf %108, %109 : vector<1x128xf32>
    %c16_i32_41 = arith.constant 16 : i32
    %111 = tpu.dynamic_rotate %110 by %c16_i32_41 dim 1 : vector<1x128xf32>, i32 -> vector<1x128xf32>
    %112 = arith.addf %110, %111 : vector<1x128xf32>
    %c32_i32_42 = arith.constant 32 : i32
    %113 = tpu.dynamic_rotate %112 by %c32_i32_42 dim 1 : vector<1x128xf32>, i32 -> vector<1x128xf32>
    %114 = arith.addf %112, %113 : vector<1x128xf32>
    %c64_i32_43 = arith.constant 64 : i32
    %115 = tpu.dynamic_rotate %114 by %c64_i32_43 dim 1 : vector<1x128xf32>, i32 -> vector<1x128xf32>
    %116 = arith.addf %114, %115 : vector<1x128xf32>
    %cst_44 = arith.constant 0.001953125 : f32
    %117 = vector.broadcast %cst_44 : f32 to vector<1x128xf32>
    %118 = arith.mulf %116, %117 : vector<1x128xf32>
    %cst_45 = arith.constant 9.99999974E-6 : f32
    %119 = vector.broadcast %cst_45 : f32 to vector<1x128xf32>
    %120 = arith.addf %118, %119 : vector<1x128xf32>
    %121 = math.rsqrt %120 : vector<1x128xf32>
    %122 = arith.mulf %90, %121 : vector<1x128xf32>
    %123 = vector.broadcast %122 : vector<1x128xf32> to vector<32x128xf32>
    %124 = arith.mulf %105, %123 : vector<32x128xf32>
    %125 = vector.broadcast %91 : vector<1x128xf32> to vector<32x128xf32>
    %126 = arith.addf %124, %125 : vector<32x128xf32>
    %cst_46 = arith.constant 0.000000e+00 : f32
    %127 = vector.broadcast %cst_46 : f32 to vector<32x128xf32>
    %128 = arith.maximumf %126, %127 : vector<32x128xf32>
    %c0_47 = arith.constant 0 : index
    %c0_48 = arith.constant 0 : index
    %129 = vector.load %arg5[%c0_47, %c0_48] : memref<32x128xf32, #tpu.memory_space<vmem>>, vector<32x128xf32>
    tpu.vector_store %arg5[%c0_47, %c0_48], %128 {strides = array<i32>} : memref<32x128xf32, #tpu.memory_space<vmem>>, vector<32x128xf32>,
    return
  }
  func.func @transform_0(%arg0: i32) -> (i32, i32) {
    %c0_i32 = arith.constant 0 : i32
    %c0_i32_0 = arith.constant 0 : i32
    %c0_i32_1 = arith.constant 0 : i32
    return %c0_i32, %c0_i32_0 : i32, i32
  }
  func.func @transform_1(%arg0: i32) -> (i32, i32) {
    %c0_i32 = arith.constant 0 : i32
    %c0_i32_0 = arith.constant 0 : i32
    %c0_i32_1 = arith.constant 0 : i32
    return %c0_i32, %c0_i32_0 : i32, i32
  }
  func.func @transform_2(%arg0: i32) -> (i32, i32) {
    %c0_i32 = arith.constant 0 : i32
    %c0_i32_0 = arith.constant 0 : i32
    %c0_i32_1 = arith.constant 0 : i32
    return %c0_i32, %c0_i32_0 : i32, i32
  }
  func.func @transform_3(%arg0: i32) -> (i32, i32) {
    %c0_i32 = arith.constant 0 : i32
    %c0_i32_0 = arith.constant 0 : i32
    %c0_i32_1 = arith.constant 0 : i32
    return %c0_i32, %c0_i32_0 : i32, i32
  }
  func.func @transform_4(%arg0: i32) -> (i32, i32) {
    %c0_i32 = arith.constant 0 : i32
    %c0_i32_0 = arith.constant 0 : i32
    %c0_i32_1 = arith.constant 0 : i32
    return %c0_i32, %c0_i32_0 : i32, i32
  }
}

</mosaic_0001>

<llo_original>
// kernel: tpu_custom_call.1
$region0: #{tpu_custom_call.1}
  #allocation0 [shape = 'u32[]', space=smem, size = 0x4, offset = 0x4, fixed_abs, tag = 'smem constant byte address 0x4 - core index']
  #allocation1 [shape = 'u32[144,128]{1,0:T(1,128)}', space=vmem, size = 0x12000, scoped, tag = 'internal scratch']
  %s0 = inlined_call_operand.hbm [shape: bf16[32,64], index: 0, kind: input, shape index: {}]
  %s1 = inlined_call_operand.hbm [shape: bf16[192,128], index: 1, kind: input, shape index: {}]
  %s2 = inlined_call_operand.hbm [shape: bf16[384,128], index: 2, kind: input, shape index: {}]
  %s3 = inlined_call_operand.vmem [shape: f32[4,128], index: 3, kind: input, shape index: {}]
  %s4 = inlined_call_operand.hbm [shape: f32[32,128], index: 4, kind: output, shape index: {}]
  %s5 = sld [smem:[#allocation0]]
  $region38: #{tpu_custom_call.1} parent=0
    _
  %s7 = ssub.s32 1, %s5
  %s8 = scalar_select 0, %s7, %s5
  $region1: #{tpu_custom_call.1} parent=0
    #allocation2 [shape = 'u8[8192]{0}', space=vmem, size = 0x2000, scoped, tag = 'input window, operand 0, single buffered']
    #allocation3 [shape = 's32[1]{0}', space=sflag, size = 0x4, scoped, tag = 'scoped memory for tpu_custom_call.1']
    #allocation4 [shape = 's32[1]{0}', space=sflag, size = 0x4, scoped, tag = 'scoped memory for tpu_custom_call.1']
    #allocation5 [shape = 'u8[49152]{0}', space=vmem, size = 0xc000, scoped, tag = 'input window, operand 1, single buffered']
    #allocation6 [shape = 's32[1]{0}', space=sflag, size = 0x4, scoped, tag = 'scoped memory for tpu_custom_call.1']
    #allocation7 [shape = 'u8[98304]{0}', space=vmem, size = 0x18000, scoped, tag = 'input window, operand 2, single buffered']
    #allocation8 [shape = 'u8[16384]{0}', space=vmem, size = 0x4000, scoped, tag = 'output window, operand 0, single buffered']
    %9 = vsyncpa [#allocation3], 0
    %10 = vsyncpa [#allocation6], 0
    %11 = vsyncpa [#allocation4], 0
    // Predicated region
    $region2: #{tpu_custom_call.1} parent=1 // pred_check
      _
    $region3: #{tpu_custom_call.1} parent=1 // pred_check_branch
      %13 = sbr.rel (0) target = $region5
    $region4: #{tpu_custom_call.1} parent=1 // pred_region
      %s15 = ssub.s32 256, 256
      %16 = vsyncadd [#allocation3], %s15
      %s17 = sshll.u32 [#allocation2], 4
      %s18 = int_to_ptr.vmem [resolvable:$true] %s17
      %23 = dma.hbm_to_vmem [thread:$0]  %s0, 256, %s18, [#allocation3], 64, 64, 4
    $region5: #{tpu_custom_call.1} parent=1 // pred_fallthru
      _
    // Predicated region
    $region6: #{tpu_custom_call.1} parent=1 // pred_check
      _
    $region7: #{tpu_custom_call.1} parent=1 // pred_check_branch
      %25 = sbr.rel (0) target = $region9
    $region8: #{tpu_custom_call.1} parent=1 // pred_region
      %s27 = ssub.s32 1536, 1536
      %28 = vsyncadd [#allocation6], %s27
      %s29 = sshll.u32 [#allocation5], 4
      %s30 = int_to_ptr.vmem [resolvable:$true] %s29
      %35 = dma.hbm_to_vmem [thread:$0]  %s1, 1536, %s30, [#allocation6], 64, 64, 4
    $region9: #{tpu_custom_call.1} parent=1 // pred_fallthru
      _
    // Predicated region
    $region10: #{tpu_custom_call.1} parent=1 // pred_check
      _
    $region11: #{tpu_custom_call.1} parent=1 // pred_check_branch
      %37 = sbr.rel (0) target = $region13
    $region12: #{tpu_custom_call.1} parent=1 // pred_region
      %s39 = ssub.s32 3072, 3072
      %40 = vsyncadd [#allocation6], %s39
      %s41 = sshll.u32 [#allocation7], 4
      %s42 = int_to_ptr.vmem [resolvable:$true] %s41
      %47 = dma.hbm_to_vmem [thread:$0]  %s2, 3072, %s42, [#allocation6], 64, 64, 4
    $region13: #{tpu_custom_call.1} parent=1 // pred_fallthru
      _
    // Predicated region
    $region14: #{tpu_custom_call.1} parent=1 // pred_check
      _
    $region15: #{tpu_custom_call.1} parent=1 // pred_check_branch
      %49 = sbr.rel (0) target = $region17
    $region16: #{tpu_custom_call.1} parent=1 // pred_region
      _
    $region17: #{tpu_custom_call.1} parent=1 // pred_fallthru
      _
    // Predicated region
    $region18: #{tpu_custom_call.1} parent=1 // pred_check
      _
    $region19: #{tpu_custom_call.1} parent=1 // pred_check_branch
      %51 = sbr.rel (0) target = $region21
    $region20: #{tpu_custom_call.1} parent=1 // pred_region
      %52 = dma.done [#allocation3], 256
    $region21: #{tpu_custom_call.1} parent=1 // pred_fallthru
      _
    // Predicated region
    $region22: #{tpu_custom_call.1} parent=1 // pred_check
      _
    $region23: #{tpu_custom_call.1} parent=1 // pred_check_branch
      %54 = sbr.rel (0) target = $region25
    $region24: #{tpu_custom_call.1} parent=1 // pred_region
      %55 = dma.done [#allocation6], 1536
    $region25: #{tpu_custom_call.1} parent=1 // pred_fallthru
      _
    // Predicated region
    $region26: #{tpu_custom_call.1} parent=1 // pred_check
      _
    $region27: #{tpu_custom_call.1} parent=1 // pred_check_branch
      %57 = sbr.rel (0) target = $region29
    $region28: #{tpu_custom_call.1} parent=1 // pred_region
      %58 = dma.done [#allocation6], 3072
    $region29: #{tpu_custom_call.1} parent=1 // pred_fallthru
      _
    %v60 = vlaneseq
    %v61 = vshrl.u32 %v60, 7
    %v62 = vadd.s32 %v61, 8
    %v63 = vadd.s32 %v61, 16
    %v64 = vadd.s32 %v61, 24
    %vm65 = vcmp.lt.s32.totalorder %v61, 0
    %v66 = vsub.s32 0, %v61
    %v67 = vsel %vm65, %v66, %v61
    %v68 = vshrl.u32 %v67, 4
    %v69 = vand.u32 %v67, 15
    %v70 = vsub.s32 0, %v69
    %v71 = vsel %vm65, %v70, %v69
    %vm72 = vcmp.lt.s32.totalorder %v62, 0
    %v73 = vsub.s32 0, %v62
    %v74 = vsel %vm72, %v73, %v62
    %v75 = vshrl.u32 %v74, 4
    %v76 = vand.u32 %v74, 15
    %v77 = vsub.s32 0, %v76
    %v78 = vsel %vm72, %v77, %v76
    %vm79 = vcmp.lt.s32.totalorder %v63, 0
    %v80 = vsub.s32 0, %v63
    %v81 = vsel %vm79, %v80, %v63
    %v82 = vshrl.u32 %v81, 4
    %v83 = vand.u32 %v81, 15
    %v84 = vsub.s32 0, %v83
    %v85 = vsel %vm79, %v84, %v83
    %vm86 = vcmp.lt.s32.totalorder %v64, 0
    %v87 = vsub.s32 0, %v64
    %v88 = vsel %vm86, %v87, %v64
    %v89 = vshrl.u32 %v88, 4
    %v90 = vand.u32 %v88, 15
    %v91 = vsub.s32 0, %v90
    %v92 = vsel %vm86, %v91, %v90
    %vm93 = vcmp.ne.s32.totalorder %v71, 0
    %vm94 = vcmp.ne.s32.totalorder %v78, 0
    %vm95 = vcmp.ne.s32.totalorder %v85, 0
    %vm96 = vcmp.ne.s32.totalorder %v92, 0
    %vm97 = vcmp.lt.s32.totalorder %v71, 0
    %vm98 = vcmp.lt.s32.totalorder %v78, 0
    %vm99 = vcmp.lt.s32.totalorder %v85, 0
    %vm100 = vcmp.lt.s32.totalorder %v92, 0
    %vm101 = vmand %vm97, %vm93
    %vm102 = vmand %vm98, %vm94
    %vm103 = vmand %vm99, %vm95
    %vm104 = vmand %vm100, %vm96
    %v105 = vadd.s32 %v71, 16
    %v106 = vadd.s32 %v78, 16
    %v107 = vadd.s32 %v85, 16
    %v108 = vadd.s32 %v92, 16
    %v109 = vsel %vm101, %v105, %v71
    %v110 = vsel %vm102, %v106, %v78
    %v111 = vsel %vm103, %v107, %v85
    %v112 = vsel %vm104, %v108, %v92
    %vm113 = vcmp.ne.s32.totalorder %v109, 0
    %vm114 = vcmp.ne.s32.totalorder %v110, 0
    %vm115 = vcmp.ne.s32.totalorder %v111, 0
    %vm116 = vcmp.ne.s32.totalorder %v112, 0
    %vm117 = vcmp.ne.s32.totalorder %v109, 15
    %vm118 = vcmp.ne.s32.totalorder %v110, 15
    %vm119 = vcmp.ne.s32.totalorder %v111, 15
    %vm120 = vcmp.ne.s32.totalorder %v112, 15
    %v121 = vld [vmem:[#allocation2] sm:$0xf]
    %v122 = vld [vmem:[#allocation2 + $0x4] sm:$0xf]
    %v123 = vld [vmem:[#allocation2 + $0x8] sm:$0xf]
    %v124 = vld [vmem:[#allocation2 + $0xc] sm:$0xf]
    %v125 = vunpack.c.l.bf16 %v121
    %v126 = vunpack.c.l.bf16 %v122
    %v127 = vunpack.c.l.bf16 %v123
    %v128 = vunpack.c.l.bf16 %v124
    %v129 = vrot.slane %v125, 7
    %v130 = vrot.slane %v126, 7
    %v131 = vrot.slane %v127, 7
    %v132 = vrot.slane %v128, 7
    %vm133 = vcmp.lt.s32.totalorder %v61, 1
    %v134 = vsel %vm133, %v131, %v132
    %v135 = vsel %vm133, %v130, %v131
    %v136 = vsel %vm133, %v129, %v130
    %v137 = vsel %vm133, %v132, %v129
    %v138 = vsel %vm113, 1, 0
    %v139 = vsel %vm114, 1, 0
    %v140 = vsel %vm115, 1, 0
    %v141 = vsel %vm116, 1, 0
    %vm142 = vcmp.eq.s32.totalorder %v138, 1
    %vm143 = vcmp.eq.s32.totalorder %v139, 1
    %vm144 = vcmp.eq.s32.totalorder %v140, 1
    %vm145 = vcmp.eq.s32.totalorder %v141, 1
    %v146 = vsel %vm142, %v137, 0.0
    %v147 = vsel %vm143, %v136, 0.0
    %v148 = vsel %vm144, %v135, 0.0
    %v149 = vsel %vm145, %v134, 0.0
    %v150 = vrot.slane %v125, 1
    %v151 = vrot.slane %v126, 1
    %v152 = vrot.slane %v127, 1
    %v153 = vrot.slane %v128, 1
    %vm154 = vcmp.lt.s32.totalorder %v61, 7
    %v155 = vsel %vm154, %v152, %v153
    %v156 = vsel %vm154, %v151, %v152
    %v157 = vsel %vm154, %v150, %v151
    %v158 = vsel %vm154, %v153, %v150
    %v159 = vsel %vm117, 1, 0
    %v160 = vsel %vm118, 1, 0
    %v161 = vsel %vm119, 1, 0
    %v162 = vsel %vm120, 1, 0
    %vm163 = vcmp.eq.s32.totalorder %v159, 1
    %vm164 = vcmp.eq.s32.totalorder %v160, 1
    %vm165 = vcmp.eq.s32.totalorder %v161, 1
    %vm166 = vcmp.eq.s32.totalorder %v162, 1
    %v167 = vsel %vm163, %v157, 0.0
    %v168 = vsel %vm164, %v156, 0.0
    %v169 = vsel %vm165, %v155, 0.0
    %v170 = vsel %vm166, %v158, 0.0
    %175 = vrot.lane.b32.xlu0 %v125, 64
    %v176 = vpop.permute.xlu0 %175
    %177 = vrot.lane.b32.xlu0 %v126, 64
    %v178 = vpop.permute.xlu0 %177
    %179 = vrot.lane.b32.xlu0 %v127, 64
    %v180 = vpop.permute.xlu0 %179
    %181 = vrot.lane.b32.xlu0 %v128, 64
    %v182 = vpop.permute.xlu0 %181
    %vm187 = vcmask 523264
    %v188 = vsel %vm187, %v146, %v176
    %v189 = vsel %vm187, %v147, %v178
    %v190 = vsel %vm187, %v148, %v180
    %v191 = vsel %vm187, %v149, %v182
    %v192 = vpack.c.bf16 %v189, %v188
    %v193 = vpack.c.bf16 %v168, %v167
    %v194 = vpack.c.bf16 %v191, %v190
    %v195 = vpack.c.bf16 %v170, %v169
    %v196 = vld [vmem:[#allocation5] sm:$0xf]
    %v197 = vld [vmem:[#allocation5 + $0x4] sm:$0xf]
    %v198 = vld [vmem:[#allocation5 + $0x8] sm:$0xf]
    %v199 = vld [vmem:[#allocation5 + $0xc] sm:$0xf]
    %v200 = vld [vmem:[#allocation5 + $0x10] sm:$0xf]
    %v201 = vld [vmem:[#allocation5 + $0x14] sm:$0xf]
    %v202 = vld [vmem:[#allocation5 + $0x18] sm:$0xf]
    %v203 = vld [vmem:[#allocation5 + $0x1c] sm:$0xf]
    %v204 = vld [vmem:[#allocation5 + $0x20] sm:$0xf]
    %v205 = vld [vmem:[#allocation5 + $0x24] sm:$0xf]
    %v206 = vld [vmem:[#allocation5 + $0x28] sm:$0xf]
    %v207 = vld [vmem:[#allocation5 + $0x2c] sm:$0xf]
    %v208 = vld [vmem:[#allocation5 + $0x30] sm:$0xf]
    %v209 = vld [vmem:[#allocation5 + $0x34] sm:$0xf]
    %v210 = vld [vmem:[#allocation5 + $0x38] sm:$0xf]
    %v211 = vld [vmem:[#allocation5 + $0x3c] sm:$0xf]
    %v212 = vld [vmem:[#allocation5 + $0x40] sm:$0xf]
    %v213 = vld [vmem:[#allocation5 + $0x44] sm:$0xf]
    %v214 = vld [vmem:[#allocation5 + $0x48] sm:$0xf]
    %v215 = vld [vmem:[#allocation5 + $0x4c] sm:$0xf]
    %v216 = vld [vmem:[#allocation5 + $0x50] sm:$0xf]
    %v217 = vld [vmem:[#allocation5 + $0x54] sm:$0xf]
    %v218 = vld [vmem:[#allocation5 + $0x58] sm:$0xf]
    %v219 = vld [vmem:[#allocation5 + $0x5c] sm:$0xf]
    %v244 = vunpack.c.l.b16 %v196
    %v245 = vunpack.c.l.b16 %v197
    %v246 = vunpack.c.l.b16 %v198
    %v247 = vunpack.c.l.b16 %v199
    %v248 = vunpack.c.l.b16 %v200
    %v249 = vunpack.c.l.b16 %v201
    %v250 = vunpack.c.l.b16 %v202
    %v251 = vunpack.c.l.b16 %v203
    %v252 = vunpack.c.l.b16 %v204
    %v253 = vunpack.c.l.b16 %v205
    %v254 = vunpack.c.l.b16 %v206
    %v255 = vunpack.c.l.b16 %v207
    %v256 = vunpack.c.l.b16 %v208
    %v257 = vunpack.c.l.b16 %v209
    %v258 = vunpack.c.l.b16 %v210
    %v259 = vunpack.c.l.b16 %v211
    %v260 = vunpack.c.l.b16 %v212
    %v261 = vunpack.c.l.b16 %v213
    %v262 = vunpack.c.l.b16 %v214
    %v263 = vunpack.c.l.b16 %v215
    %v264 = vunpack.c.l.b16 %v216
    %v265 = vunpack.c.l.b16 %v217
    %v266 = vunpack.c.l.b16 %v218
    %v267 = vunpack.c.l.b16 %v219
    %v268 = vpack.c.b16 %v245, %v244
    %v269 = vpack.c.b16 %v247, %v246
    %v270 = vpack.c.b16 %v249, %v248
    %v271 = vpack.c.b16 %v251, %v250
    %v272 = vpack.c.b16 %v253, %v252
    %v273 = vpack.c.b16 %v255, %v254
    %v274 = vpack.c.b16 %v257, %v256
    %v275 = vpack.c.b16 %v259, %v258
    %v276 = vpack.c.b16 %v261, %v260
    %v277 = vpack.c.b16 %v263, %v262
    %v278 = vpack.c.b16 %v265, %v264
    %v279 = vpack.c.b16 %v267, %v266
    %v293 = vsel %vm187, %v193, 0
    %v296 = vsel %vm187, %v195, 0
    %298 = vmatprep.subr.bf16.mxu0 0
    %299 = vmatpush1.bf16.msra.mxu0 %v268
    %300 = vmatprep.subr.bf16.mxu0 0
    %301 = vmatpush1.bf16.msra.mxu0 %v269
    %302 = vmatprep.subr.bf16.mxu0 0
    %303 = vmatpush1.bf16.msra.mxu0 %v270
    %304 = vmatprep.subr.bf16.mxu0 0
    %305 = vmatpush1.bf16.msra.mxu0 %v271
    %306 = vmatprep.subr.bf16.mxu0 0
    %307 = vmatpush1.bf16.msra.mxu0 %v272
    %308 = vmatprep.subr.bf16.mxu0 0
    %309 = vmatpush1.bf16.msra.mxu0 %v273
    %310 = vmatprep.subr.bf16.mxu0 0
    %311 = vmatpush1.bf16.msra.mxu0 %v274
    %312 = vmatprep.subr.bf16.mxu0 0
    %313 = vmatpush1.bf16.msra.mxu0 %v275
    %314 = vmatprep.subr.bf16.mxu0 0
    %315 = vmatpush1.bf16.msra.mxu0 %v276
    %316 = vmatprep.subr.bf16.mxu0 0
    %317 = vmatpush1.bf16.msra.mxu0 %v277
    %318 = vmatprep.subr.bf16.mxu0 0
    %319 = vmatpush1.bf16.msra.mxu0 %v278
    %320 = vmatprep.subr.bf16.mxu0 0
    %321 = vmatpush1.bf16.msra.mxu0 %v279
    %322 = vmatprep.subr.bf16.mxu0 0
    %323 = vmatpush1.bf16.msra.mxu0 0
    %324 = vmatprep.subr.bf16.mxu0 0
    %325 = vmatpush1.bf16.msra.mxu0 0
    %326 = vmatprep.subr.bf16.mxu0 0
    %327 = vmatpush1.bf16.msra.mxu0 0
    %328 = vmatprep.subr.bf16.mxu0 0
    %329 = vmatpush1.bf16.msra.mxu0 0
    %330 = vmatprep.mubr.bf16.mxu0 %v293
    %331 = vmatmul.mubr.bf16.gmra.mrb[0].mxu0 %v192
    %v332 = vpop.f32.mrb[0].mxu0
    %v333 = vadd.f32 0.0, %v332
    %v334 = vpop.f32.mrb[0].mxu0
    %v335 = vpop.f32.mrb[0].mxu0
    %v336 = vadd.f32 0.0, %v335
    %v337 = vpop.f32.mrb[0].mxu0
    %338 = vmatprep.mubr.bf16.mxu0 %v296
    %339 = vmatmul.mubr.bf16.gmra.mrb[0].mxu0 %v194
    %v340 = vpop.f32.mrb[0].mxu0
    %v341 = vadd.f32 0.0, %v340
    %v342 = vpop.f32.mrb[0].mxu0
    %v343 = vpop.f32.mrb[0].mxu0
    %v344 = vadd.f32 0.0, %v343
    %v345 = vpop.f32.mrb[0].mxu0
    %346 = vdwg.mxu0
    %v347 = vld [vmem:[%s3] sm:$0x1]
    %v348 = vld [vmem:[%s3 + $0x1] sm:$0x1]
    %v349 = vadd.f32 %v333, %v336
    %v350 = vadd.f32 %v349, %v341
    %v351 = vadd.f32 %v350, %v344
    %v352 = vrot.slane %v351, 4
    %v353 = vadd.f32 %v351, %v352
    %v354 = vrot.slane %v353, 2
    %v355 = vadd.f32 %v353, %v354
    %v356 = vrot.slane %v355, 1
    %v357 = vadd.f32 %v355, %v356
    %358 = vrot.lane.b32.xlu0 %v357, 8
    %v359 = vpop.permute.xlu0 %358
    %v360 = vadd.f32 %v357, %v359
    %361 = vrot.lane.b32.xlu0 %v360, 16
    %v362 = vpop.permute.xlu0 %361
    %v363 = vadd.f32 %v360, %v362
    %364 = vrot.lane.b32.xlu0 %v363, 32
    %v365 = vpop.permute.xlu0 %364
    %v366 = vadd.f32 %v363, %v365
    %367 = vrot.lane.b32.xlu0 %v366, 64
    %v368 = vpop.permute.xlu0 %367
    %v369 = vadd.f32 %v366, %v368
    %v370 = vmul.f32 %v369, 0.001953125
    %v371 = vlaneseq
    %v372 = vshrl.u32 %v371, 7
    %v373 = vsub.s32 0, %v372
    %v374 = vrot.slane %v370, %v373
    %v375 = vsub.f32 %v333, %v374
    %v376 = vsub.f32 %v336, %v374
    %v377 = vsub.f32 %v341, %v374
    %v378 = vsub.f32 %v344, %v374
    %v379 = vmul.f32 %v375, %v375
    %v380 = vmul.f32 %v376, %v376
    %v381 = vmul.f32 %v377, %v377
    %v382 = vmul.f32 %v378, %v378
    %v383 = vadd.f32 %v379, %v380
    %v384 = vadd.f32 %v383, %v381
    %v385 = vadd.f32 %v384, %v382
    %v386 = vrot.slane %v385, 4
    %v387 = vadd.f32 %v385, %v386
    %v388 = vrot.slane %v387, 2
    %v389 = vadd.f32 %v387, %v388
    %v390 = vrot.slane %v389, 1
    %v391 = vadd.f32 %v389, %v390
    %392 = vrot.lane.b32.xlu0 %v391, 8
    %v393 = vpop.permute.xlu0 %392
    %v394 = vadd.f32 %v391, %v393
    %395 = vrot.lane.b32.xlu0 %v394, 16
    %v396 = vpop.permute.xlu0 %395
    %v397 = vadd.f32 %v394, %v396
    %398 = vrot.lane.b32.xlu0 %v397, 32
    %v399 = vpop.permute.xlu0 %398
    %v400 = vadd.f32 %v397, %v399
    %401 = vrot.lane.b32.xlu0 %v400, 64
    %v402 = vpop.permute.xlu0 %401
    %v403 = vadd.f32 %v400, %v402
    %v404 = vmul.f32 %v403, 0.001953125
    %v405 = vadd.f32 %v404, 1e-05
    %v406 = vrsqrt.pop %v405
    %v407 = vmul.f32 %v347, %v406
    %v408 = vlaneseq
    %v409 = vshrl.u32 %v408, 7
    %v410 = vsub.s32 0, %v409
    %v411 = vrot.slane %v407, %v410
    %v412 = vmul.f32 %v375, %v411
    %v413 = vmul.f32 %v376, %v411
    %v414 = vmul.f32 %v377, %v411
    %v415 = vmul.f32 %v378, %v411
    %v416 = vlaneseq
    %v417 = vshrl.u32 %v416, 7
    %v418 = vsub.s32 0, %v417
    %v419 = vrot.slane %v348, %v418
    %v420 = vadd.f32 %v412, %v419
    %v421 = vadd.f32 %v413, %v419
    %v422 = vadd.f32 %v414, %v419
    %v423 = vadd.f32 %v415, %v419
    %v424 = vmax.f32 %v420, 0.0
    %v425 = vmax.f32 %v421, 0.0
    %v426 = vmax.f32 %v422, 0.0
    %v427 = vmax.f32 %v423, 0.0
    %v428 = vrot.slane %v424, 7
    %v429 = vrot.slane %v425, 7
    %v430 = vrot.slane %v426, 7
    %v431 = vrot.slane %v427, 7
    %v432 = vsel %vm133, %v430, %v431
    %v433 = vsel %vm133, %v429, %v430
    %v434 = vsel %vm133, %v428, %v429
    %v435 = vsel %vm133, %v431, %v428
    %v436 = vsel %vm142, %v435, 0.0
    %v437 = vsel %vm143, %v434, 0.0
    %v438 = vsel %vm144, %v433, 0.0
    %v439 = vsel %vm145, %v432, 0.0
    %v440 = vrot.slane %v424, 1
    %v441 = vrot.slane %v425, 1
    %v442 = vrot.slane %v426, 1
    %v443 = vrot.slane %v427, 1
    %v444 = vsel %vm154, %v442, %v443
    %v445 = vsel %vm154, %v441, %v442
    %v446 = vsel %vm154, %v440, %v441
    %v447 = vsel %vm154, %v443, %v440
    %v448 = vsel %vm163, %v446, 0.0
    %v449 = vsel %vm164, %v445, 0.0
    %v450 = vsel %vm165, %v444, 0.0
    %v451 = vsel %vm166, %v447, 0.0
    %v452 = vpack.c.bf16 %v437, %v436
    %v453 = vpack.c.bf16 %v425, %v424
    %v454 = vpack.c.bf16 %v449, %v448
    %v455 = vpack.c.bf16 %v439, %v438
    %v456 = vpack.c.bf16 %v427, %v426
    %v457 = vpack.c.bf16 %v451, %v450
    %v458 = vld [vmem:[#allocation7] sm:$0xf]
    %v459 = vld [vmem:[#allocation7 + $0x4] sm:$0xf]
    %v460 = vld [vmem:[#allocation7 + $0x8] sm:$0xf]
    %v461 = vld [vmem:[#allocation7 + $0xc] sm:$0xf]
    %v462 = vld [vmem:[#allocation7 + $0x10] sm:$0xf]
    %v463 = vld [vmem:[#allocation7 + $0x14] sm:$0xf]
    %v464 = vld [vmem:[#allocation7 + $0x18] sm:$0xf]
    %v465 = vld [vmem:[#allocation7 + $0x1c] sm:$0xf]
    %v466 = vld [vmem:[#allocation7 + $0x20] sm:$0xf]
    %v467 = vld [vmem:[#allocation7 + $0x24] sm:$0xf]
    %v468 = vld [vmem:[#allocation7 + $0x28] sm:$0xf]
    %v469 = vld [vmem:[#allocation7 + $0x2c] sm:$0xf]
    %v470 = vld [vmem:[#allocation7 + $0x30] sm:$0xf]
    %v471 = vld [vmem:[#allocation7 + $0x34] sm:$0xf]
    %v472 = vld [vmem:[#allocation7 + $0x38] sm:$0xf]
    %v473 = vld [vmem:[#allocation7 + $0x3c] sm:$0xf]
    %v474 = vld [vmem:[#allocation7 + $0x40] sm:$0xf]
    %v475 = vld [vmem:[#allocation7 + $0x44] sm:$0xf]
    %v476 = vld [vmem:[#allocation7 + $0x48] sm:$0xf]
    %v477 = vld [vmem:[#allocation7 + $0x4c] sm:$0xf]
    %v478 = vld [vmem:[#allocation7 + $0x50] sm:$0xf]
    %v479 = vld [vmem:[#allocation7 + $0x54] sm:$0xf]
    %v480 = vld [vmem:[#allocation7 + $0x58] sm:$0xf]
    %v481 = vld [vmem:[#allocation7 + $0x5c] sm:$0xf]
    %v482 = vld [vmem:[#allocation7 + $0x60] sm:$0xf]
    %v483 = vld [vmem:[#allocation7 + $0x64] sm:$0xf]
    %v484 = vld [vmem:[#allocation7 + $0x68] sm:$0xf]
    %v485 = vld [vmem:[#allocation7 + $0x6c] sm:$0xf]
    %v486 = vld [vmem:[#allocation7 + $0x70] sm:$0xf]
    %v487 = vld [vmem:[#allocation7 + $0x74] sm:$0xf]
    %v488 = vld [vmem:[#allocation7 + $0x78] sm:$0xf]
    %v489 = vld [vmem:[#allocation7 + $0x7c] sm:$0xf]
    %v490 = vld [vmem:[#allocation7 + $0x80] sm:$0xf]
    %v491 = vld [vmem:[#allocation7 + $0x84] sm:$0xf]
    %v492 = vld [vmem:[#allocation7 + $0x88] sm:$0xf]
    %v493 = vld [vmem:[#allocation7 + $0x8c] sm:$0xf]
    %v494 = vld [vmem:[#allocation7 + $0x90] sm:$0xf]
    %v495 = vld [vmem:[#allocation7 + $0x94] sm:$0xf]
    %v496 = vld [vmem:[#allocation7 + $0x98] sm:$0xf]
    %v497 = vld [vmem:[#allocation7 + $0x9c] sm:$0xf]
    %v498 = vld [vmem:[#allocation7 + $0xa0] sm:$0xf]
    %v499 = vld [vmem:[#allocation7 + $0xa4] sm:$0xf]
    %v500 = vld [vmem:[#allocation7 + $0xa8] sm:$0xf]
    %v501 = vld [vmem:[#allocation7 + $0xac] sm:$0xf]
    %v502 = vld [vmem:[#allocation7 + $0xb0] sm:$0xf]
    %v503 = vld [vmem:[#allocation7 + $0xb4] sm:$0xf]
    %v504 = vld [vmem:[#allocation7 + $0xb8] sm:$0xf]
    %v505 = vld [vmem:[#allocation7 + $0xbc] sm:$0xf]
    %v554 = vunpack.c.l.b16 %v458
    %v555 = vunpack.c.l.b16 %v459
    %v556 = vunpack.c.l.b16 %v460
    %v557 = vunpack.c.l.b16 %v461
    %v558 = vunpack.c.l.b16 %v462
    %v559 = vunpack.c.l.b16 %v463
    %v560 = vunpack.c.l.b16 %v464
    %v561 = vunpack.c.l.b16 %v465
    %v562 = vunpack.c.l.b16 %v466
    %v563 = vunpack.c.l.b16 %v467
    %v564 = vunpack.c.l.b16 %v468
    %v565 = vunpack.c.l.b16 %v469
    %v566 = vunpack.c.l.b16 %v470
    %v567 = vunpack.c.l.b16 %v471
    %v568 = vunpack.c.l.b16 %v472
    %v569 = vunpack.c.l.b16 %v473
    %v570 = vunpack.c.l.b16 %v474
    %v571 = vunpack.c.l.b16 %v475
    %v572 = vunpack.c.l.b16 %v476
    %v573 = vunpack.c.l.b16 %v477
    %v574 = vunpack.c.l.b16 %v478
    %v575 = vunpack.c.l.b16 %v479
    %v576 = vunpack.c.l.b16 %v480
    %v577 = vunpack.c.l.b16 %v481
    %v578 = vunpack.c.l.b16 %v482
    %v579 = vunpack.c.l.b16 %v483
    %v580 = vunpack.c.l.b16 %v484
    %v581 = vunpack.c.l.b16 %v485
    %v582 = vunpack.c.l.b16 %v486
    %v583 = vunpack.c.l.b16 %v487
    %v584 = vunpack.c.l.b16 %v488
    %v585 = vunpack.c.l.b16 %v489
    %v586 = vunpack.c.l.b16 %v490
    %v587 = vunpack.c.l.b16 %v491
    %v588 = vunpack.c.l.b16 %v492
    %v589 = vunpack.c.l.b16 %v493
    %v590 = vunpack.c.l.b16 %v494
    %v591 = vunpack.c.l.b16 %v495
    %v592 = vunpack.c.l.b16 %v496
    %v593 = vunpack.c.l.b16 %v497
    %v594 = vunpack.c.l.b16 %v498
    %v595 = vunpack.c.l.b16 %v499
    %v596 = vunpack.c.l.b16 %v500
    %v597 = vunpack.c.l.b16 %v501
    %v598 = vunpack.c.l.b16 %v502
    %v599 = vunpack.c.l.b16 %v503
    %v600 = vunpack.c.l.b16 %v504
    %v601 = vunpack.c.l.b16 %v505
    %v602 = vpack.c.b16 %v555, %v554
    %v603 = vpack.c.b16 %v557, %v556
    %v604 = vpack.c.b16 %v559, %v558
    %v605 = vpack.c.b16 %v561, %v560
    %v606 = vpack.c.b16 %v563, %v562
    %v607 = vpack.c.b16 %v565, %v564
    %v608 = vpack.c.b16 %v567, %v566
    %v609 = vpack.c.b16 %v569, %v568
    %v610 = vpack.c.b16 %v571, %v570
    %v611 = vpack.c.b16 %v573, %v572
    %v612 = vpack.c.b16 %v575, %v574
    %v613 = vpack.c.b16 %v577, %v576
    %v614 = vpack.c.b16 %v579, %v578
    %v615 = vpack.c.b16 %v581, %v580
    %v616 = vpack.c.b16 %v583, %v582
    %v617 = vpack.c.b16 %v585, %v584
    %v618 = vpack.c.b16 %v587, %v586
    %v619 = vpack.c.b16 %v589, %v588
    %v620 = vpack.c.b16 %v591, %v590
    %v621 = vpack.c.b16 %v593, %v592
    %v622 = vpack.c.b16 %v595, %v594
    %v623 = vpack.c.b16 %v597, %v596
    %v624 = vpack.c.b16 %v599, %v598
    %v625 = vpack.c.b16 %v601, %v600
    %650 = vmatprep.subr.bf16.mxu0 0
    %651 = vmatpush1.bf16.msra.mxu0 %v602
    %652 = vmatprep.subr.bf16.mxu0 0
    %653 = vmatpush1.bf16.msra.mxu0 %v603
    %654 = vmatprep.subr.bf16.mxu0 0
    %655 = vmatpush1.bf16.msra.mxu0 %v604
    %656 = vmatprep.subr.bf16.mxu0 0
    %657 = vmatpush1.bf16.msra.mxu0 %v605
    %658 = vmatprep.subr.bf16.mxu0 0
    %659 = vmatpush1.bf16.msra.mxu0 %v606
    %660 = vmatprep.subr.bf16.mxu0 0
    %661 = vmatpush1.bf16.msra.mxu0 %v607
    %662 = vmatprep.subr.bf16.mxu0 0
    %663 = vmatpush1.bf16.msra.mxu0 %v608
    %664 = vmatprep.subr.bf16.mxu0 0
    %665 = vmatpush1.bf16.msra.mxu0 %v609
    %666 = vmatprep.subr.bf16.mxu0 0
    %667 = vmatpush1.bf16.msra.mxu0 %v610
    %668 = vmatprep.subr.bf16.mxu0 0
    %669 = vmatpush1.bf16.msra.mxu0 %v611
    %670 = vmatprep.subr.bf16.mxu0 0
    %671 = vmatpush1.bf16.msra.mxu0 %v612
    %672 = vmatprep.subr.bf16.mxu0 0
    %673 = vmatpush1.bf16.msra.mxu0 %v613
    %674 = vmatprep.subr.bf16.mxu0 0
    %675 = vmatpush1.bf16.msra.mxu0 %v614
    %676 = vmatprep.subr.bf16.mxu0 0
    %677 = vmatpush1.bf16.msra.mxu0 %v615
    %678 = vmatprep.subr.bf16.mxu0 0
    %679 = vmatpush1.bf16.msra.mxu0 %v616
    %680 = vmatprep.subr.bf16.mxu0 0
    %681 = vmatpush1.bf16.msra.mxu0 %v617
    %682 = vmatprep.mubr.bf16.mxu0 %v453
    %683 = vmatmul.mubr.bf16.gmra.mrb[0].mxu0 %v452
    %v684 = vpop.f32.mrb[0].mxu0
    %v685 = vadd.f32 0.0, %v684
    %v686 = vpop.f32.mrb[0].mxu0
    %v687 = vpop.f32.mrb[0].mxu0
    %v688 = vadd.f32 0.0, %v687
    %v689 = vpop.f32.mrb[0].mxu0
    %690 = vmatprep.mubr.bf16.mxu0 %v456
    %691 = vmatmul.mubr.bf16.gmra.mrb[0].mxu0 %v455
    %v692 = vpop.f32.mrb[0].mxu0
    %v693 = vadd.f32 0.0, %v692
    %v694 = vpop.f32.mrb[0].mxu0
    %v695 = vpop.f32.mrb[0].mxu0
    %v696 = vadd.f32 0.0, %v695
    %v697 = vpop.f32.mrb[0].mxu0
    %698 = vdwg.mxu0
    %699 = vmatprep.subr.bf16.mxu0 0
    %700 = vmatpush1.bf16.msra.mxu0 %v618
    %701 = vmatprep.subr.bf16.mxu0 0
    %702 = vmatpush1.bf16.msra.mxu0 %v619
    %703 = vmatprep.subr.bf16.mxu0 0
    %704 = vmatpush1.bf16.msra.mxu0 %v620
    %705 = vmatprep.subr.bf16.mxu0 0
    %706 = vmatpush1.bf16.msra.mxu0 %v621
    %707 = vmatprep.subr.bf16.mxu0 0
    %708 = vmatpush1.bf16.msra.mxu0 %v622
    %709 = vmatprep.subr.bf16.mxu0 0
    %710 = vmatpush1.bf16.msra.mxu0 %v623
    %711 = vmatprep.subr.bf16.mxu0 0
    %712 = vmatpush1.bf16.msra.mxu0 %v624
    %713 = vmatprep.subr.bf16.mxu0 0
    %714 = vmatpush1.bf16.msra.mxu0 %v625
    %715 = vmatprep.subr.bf16.mxu0 0
    %716 = vmatpush1.bf16.msra.mxu0 0
    %717 = vmatprep.subr.bf16.mxu0 0
    %718 = vmatpush1.bf16.msra.mxu0 0
    %719 = vmatprep.subr.bf16.mxu0 0
    %720 = vmatpush1.bf16.msra.mxu0 0
    %721 = vmatprep.subr.bf16.mxu0 0
    %722 = vmatpush1.bf16.msra.mxu0 0
    %723 = vmatprep.subr.bf16.mxu0 0
    %724 = vmatpush1.bf16.msra.mxu0 0
    %725 = vmatprep.subr.bf16.mxu0 0
    %726 = vmatpush1.bf16.msra.mxu0 0
    %727 = vmatprep.subr.bf16.mxu0 0
    %728 = vmatpush1.bf16.msra.mxu0 0
    %729 = vmatprep.subr.bf16.mxu0 0
    %730 = vmatpush1.bf16.msra.mxu0 0
    %731 = vmatprep.mubr.bf16.mxu0 0
    %732 = vmatmul.mubr.bf16.gmra.mrb[0].mxu0 %v454
    %v733 = vpop.f32.mrb[0].mxu0
    %v734 = vadd.f32 %v685, %v733
    %v735 = vpop.f32.mrb[0].mxu0
    %v736 = vpop.f32.mrb[0].mxu0
    %v737 = vadd.f32 %v688, %v736
    %v738 = vpop.f32.mrb[0].mxu0
    %739 = vmatprep.mubr.bf16.mxu0 0
    %740 = vmatmul.mubr.bf16.gmra.mrb[0].mxu0 %v457
    %v741 = vpop.f32.mrb[0].mxu0
    %v742 = vadd.f32 %v693, %v741
    %v743 = vpop.f32.mrb[0].mxu0
    %v744 = vpop.f32.mrb[0].mxu0
    %v745 = vadd.f32 %v696, %v744
    %v746 = vpop.f32.mrb[0].mxu0
    %747 = vdwg.mxu0
    %v748 = vld [vmem:[%s3 + $0x2] sm:$0x1]
    %v749 = vld [vmem:[%s3 + $0x3] sm:$0x1]
    %v750 = vadd.f32 %v734, %v737
    %v751 = vadd.f32 %v750, %v742
    %v752 = vadd.f32 %v751, %v745
    %v753 = vrot.slane %v752, 4
    %v754 = vadd.f32 %v752, %v753
    %v755 = vrot.slane %v754, 2
    %v756 = vadd.f32 %v754, %v755
    %v757 = vrot.slane %v756, 1
    %v758 = vadd.f32 %v756, %v757
    %759 = vrot.lane.b32.xlu0 %v758, 8
    %v760 = vpop.permute.xlu0 %759
    %v761 = vadd.f32 %v758, %v760
    %762 = vrot.lane.b32.xlu0 %v761, 16
    %v763 = vpop.permute.xlu0 %762
    %v764 = vadd.f32 %v761, %v763
    %765 = vrot.lane.b32.xlu0 %v764, 32
    %v766 = vpop.permute.xlu0 %765
    %v767 = vadd.f32 %v764, %v766
    %768 = vrot.lane.b32.xlu0 %v767, 64
    %v769 = vpop.permute.xlu0 %768
    %v770 = vadd.f32 %v767, %v769
    %v771 = vmul.f32 %v770, 0.001953125
    %v772 = vlaneseq
    %v773 = vshrl.u32 %v772, 7
    %v774 = vsub.s32 0, %v773
    %v775 = vrot.slane %v771, %v774
    %v776 = vsub.f32 %v734, %v775
    %v777 = vsub.f32 %v737, %v775
    %v778 = vsub.f32 %v742, %v775
    %v779 = vsub.f32 %v745, %v775
    %v780 = vmul.f32 %v776, %v776
    %v781 = vmul.f32 %v777, %v777
    %v782 = vmul.f32 %v778, %v778
    %v783 = vmul.f32 %v779, %v779
    %v784 = vadd.f32 %v780, %v781
    %v785 = vadd.f32 %v784, %v782
    %v786 = vadd.f32 %v785, %v783
    %v787 = vrot.slane %v786, 4
    %v788 = vadd.f32 %v786, %v787
    %v789 = vrot.slane %v788, 2
    %v790 = vadd.f32 %v788, %v789
    %v791 = vrot.slane %v790, 1
    %v792 = vadd.f32 %v790, %v791
    %793 = vrot.lane.b32.xlu0 %v792, 8
    %v794 = vpop.permute.xlu0 %793
    %v795 = vadd.f32 %v792, %v794
    %796 = vrot.lane.b32.xlu0 %v795, 16
    %v797 = vpop.permute.xlu0 %796
    %v798 = vadd.f32 %v795, %v797
    %799 = vrot.lane.b32.xlu0 %v798, 32
    %v800 = vpop.permute.xlu0 %799
    %v801 = vadd.f32 %v798, %v800
    %802 = vrot.lane.b32.xlu0 %v801, 64
    %v803 = vpop.permute.xlu0 %802
    %v804 = vadd.f32 %v801, %v803
    %v805 = vmul.f32 %v804, 0.001953125
    %v806 = vadd.f32 %v805, 1e-05
    %v807 = vrsqrt.pop %v806
    %v808 = vmul.f32 %v748, %v807
    %v809 = vlaneseq
    %v810 = vshrl.u32 %v809, 7
    %v811 = vsub.s32 0, %v810
    %v812 = vrot.slane %v808, %v811
    %v813 = vmul.f32 %v776, %v812
    %v814 = vmul.f32 %v777, %v812
    %v815 = vmul.f32 %v778, %v812
    %v816 = vmul.f32 %v779, %v812
    %v817 = vlaneseq
    %v818 = vshrl.u32 %v817, 7
    %v819 = vsub.s32 0, %v818
    %v820 = vrot.slane %v749, %v819
    %v821 = vadd.f32 %v813, %v820
    %v822 = vadd.f32 %v814, %v820
    %v823 = vadd.f32 %v815, %v820
    %v824 = vadd.f32 %v816, %v820
    %v825 = vmax.f32 %v821, 0.0
    %v826 = vmax.f32 %v822, 0.0
    %v827 = vmax.f32 %v823, 0.0
    %v828 = vmax.f32 %v824, 0.0
    %829 = vst [vmem:[#allocation8] sm:$0xff] %v825
    %830 = vst [vmem:[#allocation8 + $0x8] sm:$0xff] %v826
    %831 = vst [vmem:[#allocation8 + $0x10] sm:$0xff] %v827
    %832 = vst [vmem:[#allocation8 + $0x18] sm:$0xff] %v828
    // Predicated region
    $region30: #{tpu_custom_call.1} parent=1 // pred_check
      _
    $region31: #{tpu_custom_call.1} parent=1 // pred_check_branch
      %834 = sbr.rel (0) target = $region33
    $region32: #{tpu_custom_call.1} parent=1 // pred_region
      %s836 = ssub.s32 512, 512
      %837 = vsyncadd [#allocation4], %s836
      %s838 = sshll.u32 [#allocation8], 4
      %s839 = int_to_ptr.vmem [resolvable:$true] %s838
      %844 = dma.vmem_to_hbm [thread:$0]  %s839, 512, %s4, [#allocation4], 128, 128, 8
    $region33: #{tpu_custom_call.1} parent=1 // pred_fallthru
      _
    // Predicated region
    $region34: #{tpu_custom_call.1} parent=1 // pred_check
      _
    $region35: #{tpu_custom_call.1} parent=1 // pred_check_branch
      %846 = sbr.rel (0) target = $region37
    $region36: #{tpu_custom_call.1} parent=1 // pred_region
      %847 = dma.done [#allocation4], 512
    $region37: #{tpu_custom_call.1} parent=1 // pred_fallthru
      _
    %848 = vsyncpa [#allocation3], 1
    %849 = vsyncpa [#allocation6], 1
    %850 = vsyncpa [#allocation4], 1

</llo_original>
